<compile_context>
chip_gen: v7x
topology: tpu7x:2x2x1
jax: 0.10.0
libtpu: 0.0.40
codegen_flags: <defaults>
</compile_context>

<pallas_src>
import functools
import math

import jax
import jax.numpy as jnp
from jax.experimental import pallas as pl
from jax.experimental.pallas import tpu as pltpu


# ----------------------------------------------------------------------------
# Kernel
# ----------------------------------------------------------------------------
def _cosine_cutoff_kernel(x_ref, o_ref, *, half_scale, cutoff):
    # Compute in f32 regardless of input dtype (cheap VPU cast; exact for f32).
    xf = x_ref[...].astype(jnp.float32)
    phi = xf * half_scale          # pi*x/(2*cutoff); |phi| < pi/2 wherever x < cutoff
    u = phi * phi
    # Odd Taylor polynomial of sin(phi), degree 11; |err| <= ~6e-8 on [-pi/2, pi/2].
    p = -2.5052108e-08
    p = p * u + 2.7557319e-06
    p = p * u - 1.9841270e-04
    p = p * u + 8.3333333e-03
    p = p * u - 1.6666667e-01
    p = p * u + 1.0
    s = p * phi                    # ~ sin(phi)
    f = 1.0 - s * s                # 0.5*(1 + cos(pi*x/cutoff)) = 1 - sin^2(phi)
    # Strict `<` mask (values with x >= cutoff are selected away; the polynomial
    # value there is irrelevant, matching the torch reference semantics).
    o_ref[...] = jnp.where(xf < cutoff, f, 0.0).astype(o_ref.dtype)


# ----------------------------------------------------------------------------
# Wrapper
# ----------------------------------------------------------------------------
_SMALL_N = 65536                       # below this, plain fused XLA is cheaper
_COLS_CANDIDATES = (1024, 512, 256, 128)
_BLOCK_ELEMS = 1 << 20                 # ~1M elems/block: 4 MiB f32 / 2 MiB bf16


def _sublane_min(dtype) -> int:
    # TODO(synk): 8-byte dtypes (f64/i64) are not meaningfully supported on TPU;
    # they fall back to 8 sublanes here.
    itemsize = jnp.dtype(dtype).itemsize
    return {4: 8, 2: 16, 1: 32}.get(itemsize, 8)


def _round_up(n: int, m: int) -> int:
    return ((n + m - 1) // m) * m


def cosine_cutoff_pallas(x: jnp.ndarray, cutoff: float) -> jnp.ndarray:
    """Apply the Behler-style cosine cutoff elementwise via a Pallas TPU kernel."""
    cutoff = float(cutoff)
    orig_shape = x.shape
    dtype = x.dtype
    n = x.size
    if n == 0:
        return x

    # Small-n fast path: kernel launch + reshape plumbing dominate; a fused XLA
    # elementwise expression is strictly cheaper.
    if n < _SMALL_N:
        xf = x.astype(jnp.float32)
        f = 0.5 * (jnp.cos(xf * (math.pi / cutoff)) + 1.0)
        return jnp.where(xf < cutoff, f, 0.0).astype(dtype)

    # Pick a lane-dense column count that divides n (zero-copy reshape).  Only
    # if nothing divides do we pad the tail, and then by < 128 elements.
    x_flat = x.reshape(-1)
    cols = None
    for c in _COLS_CANDIDATES:
        if n % c == 0:
            cols = c
            break
    padded = cols is None
    if padded:
        cols = _COLS_CANDIDATES[-1]          # 128: minimal tail padding
        n_pad = _round_up(n, cols)
        x_flat = jnp.pad(x_flat, (0, n_pad - n))
    else:
        n_pad = n
    rows = n_pad // cols
    x2d = x_flat.reshape(rows, cols)

    sub = _sublane_min(dtype)
    # ~1M elements per block, rounded to the sublane granule, clamped to rows.
    block_rows = max(sub, (_BLOCK_ELEMS // cols) // sub * sub)
    block_rows = min(block_rows, _round_up(rows, sub))
    # Give the v7x megacore (2 TCs sharding the "parallel" axis) >= 2 grid steps.
    if pl.cdiv(rows, block_rows) < 2 and rows > 2 * sub:
        block_rows = _round_up(pl.cdiv(rows, 2), sub)
    grid = (pl.cdiv(rows, block_rows),)

    kernel = functools.partial(
        _cosine_cutoff_kernel,
        half_scale=math.pi / (2.0 * cutoff),
        cutoff=cutoff,
    )

    itemsize = jnp.dtype(dtype).itemsize
    cost = pl.CostEstimate(
        flops=16 * n_pad,
        transcendentals=0,
        bytes_accessed=2 * n_pad * itemsize,
    )

    out2d = pl.pallas_call(
        kernel,
        out_shape=jax.ShapeDtypeStruct((rows, cols), dtype),
        grid=grid,
        in_specs=[pl.BlockSpec((block_rows, cols), lambda i: (i, 0))],
        out_specs=pl.BlockSpec((block_rows, cols), lambda i: (i, 0)),
        compiler_params=pltpu.CompilerParams(
            dimension_semantics=("parallel",),
            # 2 in-bufs + 2 out-bufs at ~4 MiB plus f32 intermediates: raise the
            # scoped-VMEM limit explicitly (v5e default is only 16 MiB); 48 MiB
            # stays below v7x's 64 MiB physical VMEM.
            vmem_limit_bytes=48 * 1024 * 1024,
        ),
        cost_estimate=cost,
    )(x2d)

    if padded:
        return out2d.reshape(-1)[:n].reshape(orig_shape)
    return out2d.reshape(orig_shape)


class CosineCutoff:
    """JAX/Pallas equivalent of the PyTorch CosineCutoff module."""

    def __init__(self, cutoff: float):
        self.cutoff = float(cutoff)

    def __call__(self, x: jnp.ndarray) -> jnp.ndarray:
        return cosine_cutoff_pallas(x, self.cutoff)


# ----------------------------------------------------------------------------
# Self-test
# ----------------------------------------------------------------------------
def _reference(x, cutoff):
    xf = x.astype(jnp.float32)
    f = 0.5 * (jnp.cos(xf * math.pi / cutoff) + 1.0)
    return jnp.where(xf < cutoff, f, 0.0).astype(x.dtype)


if __name__ == "__main__":
    key = jax.random.PRNGKey(0)
    k1, k2, k3, k4 = jax.random.split(key, 4)
    cutoff = 5.0
    module = CosineCutoff(cutoff)

    # 1) Kernel path, zero-copy (divisible by 1024), f32.
    x1 = jax.random.uniform(k1, (2, 4, 128, 128), dtype=jnp.float32,
                            minval=0.0, maxval=2.0 * cutoff)
    # 2) Tiny ragged input -> small-n fast path.
    x2 = jax.random.uniform(k2, (3, 7, 11), dtype=jnp.float32,
                            minval=0.0, maxval=2.0 * cutoff)
    # 3) Kernel path, bf16 (dtype-aware tiling).
    x3 = jax.random.uniform(k3, (2, 256, 160), dtype=jnp.float32,
                            minval=0.0, maxval=2.0 * cutoff).astype(jnp.bfloat16)
    # 4) Kernel path that exercises the (rare) tail-padding branch.
    x4 = jax.random.uniform(k4, (70003,), dtype=jnp.float32,
                            minval=0.0, maxval=2.0 * cutoff)

    out1 = jax.block_until_ready(module(x1))
    out2 = jax.block_until_ready(module(x2))
    out3 = jax.block_until_ready(module(x3))
    out4 = jax.block_until_ready(module(x4))

    ref1 = _reference(x1, cutoff)
    ref2 = _reference(x2, cutoff)
    ref3 = _reference(x3, cutoff)
    ref4 = _reference(x4, cutoff)

    assert out1.shape == x1.shape and out1.dtype == x1.dtype
    assert out2.shape == x2.shape and out2.dtype == x2.dtype
    assert out3.shape == x3.shape and out3.dtype == x3.dtype
    assert out4.shape == x4.shape and out4.dtype == x4.dtype

    assert jnp.allclose(out1, ref1, atol=1e-5, rtol=1e-5)
    assert jnp.allclose(out2, ref2, atol=1e-5, rtol=1e-5)
    assert jnp.allclose(out3.astype(jnp.float32), ref3.astype(jnp.float32),
                        atol=1e-2, rtol=1e-2)
    assert jnp.allclose(out4, ref4, atol=1e-5, rtol=1e-5)

    print("KERNEL_OK")
</pallas_src>

<mosaic_0001>
module attributes {stable_mosaic.version = 11 : i64} {
  func.func @_cosine_cutoff_kernel(%arg0: i32, %arg1: memref<64x1024xf32, #tpu.memory_space<vmem>>, %arg2: memref<64x1024xf32, #tpu.memory_space<vmem>>) attributes {dimension_semantics = [#tpu.dimension_semantics<parallel>], iteration_bounds = array<i64: 2>, scalar_prefetch = 0 : i64, scratch_operands = 0 : i64, tpu.core_type = #tpu.core_type<tc>, window_params = [{transform_indices = @transform_0, window_bounds = array<i64: 64, 1024>}, {transform_indices = @transform_1, window_bounds = array<i64: 64, 1024>}]} {
    %c0 = arith.constant 0 : index
    %c0_0 = arith.constant 0 : index
    %0 = vector.load %arg1[%c0, %c0_0] : memref<64x1024xf32, #tpu.memory_space<vmem>>, vector<64x1024xf32>
    %cst = arith.constant 0.314159274 : f32
    %1 = vector.broadcast %cst : f32 to vector<64x1024xf32>
    %2 = arith.mulf %0, %1 : vector<64x1024xf32>
    %3 = arith.mulf %2, %2 : vector<64x1024xf32>
    %cst_1 = arith.constant -2.50521079E-8 : f32
    %4 = vector.broadcast %cst_1 : f32 to vector<64x1024xf32>
    %5 = arith.mulf %4, %3 : vector<64x1024xf32>
    %cst_2 = arith.constant 2.75573188E-6 : f32
    %6 = vector.broadcast %cst_2 : f32 to vector<64x1024xf32>
    %7 = arith.addf %5, %6 : vector<64x1024xf32>
    %8 = arith.mulf %7, %3 : vector<64x1024xf32>
    %cst_3 = arith.constant 1.98412701E-4 : f32
    %9 = vector.broadcast %cst_3 : f32 to vector<64x1024xf32>
    %10 = arith.subf %8, %9 : vector<64x1024xf32>
    %11 = arith.mulf %10, %3 : vector<64x1024xf32>
    %cst_4 = arith.constant 0.00833333284 : f32
    %12 = vector.broadcast %cst_4 : f32 to vector<64x1024xf32>
    %13 = arith.addf %11, %12 : vector<64x1024xf32>
    %14 = arith.mulf %13, %3 : vector<64x1024xf32>
    %cst_5 = arith.constant 0.166666672 : f32
    %15 = vector.broadcast %cst_5 : f32 to vector<64x1024xf32>
    %16 = arith.subf %14, %15 : vector<64x1024xf32>
    %17 = arith.mulf %16, %3 : vector<64x1024xf32>
    %cst_6 = arith.constant 1.000000e+00 : f32
    %18 = vector.broadcast %cst_6 : f32 to vector<64x1024xf32>
    %19 = arith.addf %17, %18 : vector<64x1024xf32>
    %20 = arith.mulf %19, %2 : vector<64x1024xf32>
    %21 = arith.mulf %20, %20 : vector<64x1024xf32>
    %cst_7 = arith.constant 1.000000e+00 : f32
    %22 = vector.broadcast %cst_7 : f32 to vector<64x1024xf32>
    %23 = arith.subf %22, %21 : vector<64x1024xf32>
    %cst_8 = arith.constant 5.000000e+00 : f32
    %24 = vector.broadcast %cst_8 : f32 to vector<64x1024xf32>
    %25 = arith.cmpf olt, %0, %24 : vector<64x1024xf32>
    %cst_9 = arith.constant 0.000000e+00 : f32
    %26 = vector.broadcast %cst_9 : f32 to vector<64x1024xf32>
    %27 = arith.select %25, %23, %26 : vector<64x1024xi1>, vector<64x1024xf32>
    %c0_10 = arith.constant 0 : index
    %c0_11 = arith.constant 0 : index
    %28 = vector.load %arg2[%c0_10, %c0_11] : memref<64x1024xf32, #tpu.memory_space<vmem>>, vector<64x1024xf32>
    tpu.vector_store %arg2[%c0_10, %c0_11], %27 {strides = array<i32>} : memref<64x1024xf32, #tpu.memory_space<vmem>>, vector<64x1024xf32>,
    return
  }
  func.func @transform_0(%arg0: i32) -> (i32, i32) {
    %c0_i32 = arith.constant 0 : i32
    %c0_i32_0 = arith.constant 0 : i32
    return %arg0, %c0_i32 : i32, i32
  }
  func.func @transform_1(%arg0: i32) -> (i32, i32) {
    %c0_i32 = arith.constant 0 : i32
    %c0_i32_0 = arith.constant 0 : i32
    return %arg0, %c0_i32 : i32, i32
  }
}

</mosaic_0001>

<llo_original>
// kernel: tpu_custom_call.1
$region0: #{tpu_custom_call.1}
  #allocation0 [shape = 'u32[]', space=smem, size = 0x4, offset = 0x4, fixed_abs, tag = 'smem constant byte address 0x4 - core index']
  #allocation1 [shape = 'u32[144,128]{1,0:T(1,128)}', space=vmem, size = 0x12000, scoped, tag = 'internal scratch']
  %s0 = inlined_call_operand.hbm [shape: f32[128,1024], index: 0, kind: input, shape index: {}]
  %s1 = inlined_call_operand.hbm [shape: f32[128,1024], index: 1, kind: output, shape index: {}]
  %s2 = sld [smem:[#allocation0]]
  $region41: #{tpu_custom_call.1} parent=0
    _
  %s4 = ssub.s32 1, %s2
  %s5 = scalar_select 0, %s4, %s2
  $region1: #{tpu_custom_call.1} parent=0
    #allocation2 [shape = 'u8[524288]{0}', space=vmem, size = 0x80000, scoped, tag = 'input window, operand 0']
    #allocation3 [shape = 's32[2]{0}', space=sflag, size = 0x8, scoped, tag = 'scoped memory for tpu_custom_call.1']
    #allocation4 [shape = 's32[2]{0}', space=sflag, size = 0x8, scoped, tag = 'scoped memory for tpu_custom_call.1']
    #allocation5 [shape = 'u8[524288]{0}', space=vmem, size = 0x80000, scoped, tag = 'output window, operand 0']
    %6 = vsyncpa [#allocation3], 0
    %s7 = scalar_lea.sflag [#allocation3], 1
    %8 = vsyncpa %s7, 0
    %9 = vsyncpa [#allocation4], 0
    %s10 = scalar_lea.sflag [#allocation4], 1
    %11 = vsyncpa %s10, 0
    loop: start=0, step=1, limit=4
    $region2: #{tpu_custom_call.1} parent=1 // loop_pre_header
      _
    $region3: #{tpu_custom_call.1} parent=1 // loop_header
      %s13 = sphi 0, %s17
      %p14 = scmp.ge.s32.totalorder %s13, 4
      %s23 = sphi 0, %s25
      %s26 = sphi 0, %s23
      %s27 = sphi 0, %s26
      %s43 = sphi 0, %s27
      %s49 = sphi 0, %s51
      %s52 = sphi 0, %s49
      %s53 = sphi 0, %s52
      %s69 = sphi 0, %s53
    $region4: #{tpu_custom_call.1} parent=1 // loop_header_branch
      %16 = sbr.rel (%p14) target = $region8
    $region5: #{tpu_custom_call.1} parent=1 // loop_body
      %s18 = ssub.s32 %s13, 1
      %s19 = ssub.s32 %s13, 2
      %s20 = sadd.s32 %s13, 1
      %s21 = ssub.s32 %s13, %s20
      %p22 = scmp.eq.s32.totalorder %s21, 0
      %s24 = sadd.s32 %s23, 1
      %s25 = scalar_select %p22, %s23, %s24
      %p28 = pneg %p22
      %p29 = scmp.eq.s32.totalorder %s13, 1
      %p30 = por %p28, %p29
      %p31 = scmp.ne.s32.totalorder %s23, %s26
      %p32 = scmp.eq.s32.totalorder %s13, 0
      %p33 = por %p31, %p32
      %p34 = scmp.ne.s32.totalorder %s23, %s26
      %p35 = scmp.eq.s32.totalorder %s18, 1
      %p36 = por %p34, %p35
      %p37 = scmp.ne.s32.totalorder %s26, %s27
      %p38 = scmp.eq.s32.totalorder %s18, 0
      %p39 = por %p37, %p38
      %p40 = scmp.ne.s32.totalorder %s26, %s27
      %p41 = scmp.eq.s32.totalorder %s19, 1
      %p42 = por %p40, %p41
      %p44 = scmp.ne.s32.totalorder %s27, %s43
      %p45 = scmp.eq.s32.totalorder %s19, 0
      %p46 = por %p44, %p45
      %s47 = ssub.s32 %s13, %s20
      %p48 = scmp.eq.s32.totalorder %s47, 0
      %s50 = sadd.s32 %s49, 1
      %s51 = scalar_select %p48, %s49, %s50
      %p54 = pneg %p48
      %p55 = scmp.eq.s32.totalorder %s13, 1
      %p56 = por %p54, %p55
      %p57 = scmp.ne.s32.totalorder %s49, %s52
      %p58 = scmp.eq.s32.totalorder %s13, 0
      %p59 = por %p57, %p58
      %p60 = scmp.ne.s32.totalorder %s49, %s52
      %p61 = scmp.eq.s32.totalorder %s18, 1
      %p62 = por %p60, %p61
      %p63 = scmp.ne.s32.totalorder %s52, %s53
      %p64 = scmp.eq.s32.totalorder %s18, 0
      %p65 = por %p63, %p64
      %p66 = scmp.ne.s32.totalorder %s52, %s53
      %p67 = scmp.eq.s32.totalorder %s19, 1
      %p68 = por %p66, %p67
      %p70 = scmp.ne.s32.totalorder %s53, %s69
      %p71 = scmp.eq.s32.totalorder %s19, 0
      %p72 = por %p70, %p71
      %p73 = scmp.le.s32.totalorder 1, %s13
      %p74 = scmp.lt.s32.totalorder %s13, 3
      %p75 = pnand %p73, %p74
      %p76 = pneg %p75
      // Predicated region
      $region9: #{tpu_custom_call.1} parent=5 // pred_check
        _
      $region10: #{tpu_custom_call.1} parent=5 // pred_check_branch
        %78 = sbr.rel (%p75) target = $region12
      $region11: #{tpu_custom_call.1} parent=5 // pred_region
        %s79 = ssub.s32 %s13, 1
      $region12: #{tpu_custom_call.1} parent=5 // pred_fallthru
        _
      %p80 = scmp.lt.s32.totalorder %s13, 2
      // Predicated region
      $region13: #{tpu_custom_call.1} parent=5 // pred_check
        %p81 = pneg %p80
      $region14: #{tpu_custom_call.1} parent=5 // pred_check_branch
        %83 = sbr.rel (%p81) target = $region16
      $region15: #{tpu_custom_call.1} parent=5 // pred_region
        // Predicated region
        $region17: #{tpu_custom_call.1} parent=15 // pred_check
          %p84 = pneg %p33
        $region18: #{tpu_custom_call.1} parent=15 // pred_check_branch
          %86 = sbr.rel (%p84) target = $region20
        $region19: #{tpu_custom_call.1} parent=15 // pred_region
          %s87 = sand.u32 %s23, 1
          %s88 = scalar_lea.sflag [#allocation3], %s87
          %s89 = sand.u32 %s23, 1
          %s90 = smul.addr %s89, 512
          %s91 = scalar_lea.vmem [#allocation2], %s90
          %s92 = smul.u32 8, %s13
          %s94 = ssub.s32 8192, 8192
          %95 = vsyncadd %s88, %s94
          %s96 = smul.addr %s92, 8
          %s97 = smul.addr %s96, 128
          %s98 = scalar_lea.hbm %s0, %s97
          %s99 = sshll.u32 %s91, 4
          %s100 = int_to_ptr.vmem [resolvable:$true] %s99
          %105 = dma.hbm_to_vmem [thread:$0]  %s98, 8192, %s100, %s88, 1024, 1024, 64
        $region20: #{tpu_custom_call.1} parent=15 // pred_fallthru
          _
      $region16: #{tpu_custom_call.1} parent=5 // pred_fallthru
        _
      %p106 = scmp.le.s32.totalorder 1, %s13
      %p107 = scmp.lt.s32.totalorder %s13, 3
      %p108 = pnand %p106, %p107
      %p109 = pneg %p108
      // Predicated region
      $region21: #{tpu_custom_call.1} parent=5 // pred_check
        _
      $region22: #{tpu_custom_call.1} parent=5 // pred_check_branch
        %111 = sbr.rel (%p108) target = $region24
      $region23: #{tpu_custom_call.1} parent=5 // pred_region
        %s112 = ssub.s32 %s13, 1
        %s113 = sand.u32 %s26, 1
        %s114 = scalar_lea.sflag [#allocation3], %s113
        %s115 = sand.u32 %s26, 1
        %s116 = smul.addr %s115, 512
        %s117 = scalar_lea.vmem [#allocation2], %s116
        // Predicated region
        $region25: #{tpu_custom_call.1} parent=23 // pred_check
          %p118 = pneg %p39
        $region26: #{tpu_custom_call.1} parent=23 // pred_check_branch
          %120 = sbr.rel (%p118) target = $region28
        $region27: #{tpu_custom_call.1} parent=23 // pred_region
          %121 = dma.done %s114, 8192
        $region28: #{tpu_custom_call.1} parent=23 // pred_fallthru
          _
        %s122 = sand.u32 %s26, 1
        %s123 = scalar_lea.sflag [#allocation3], %s122
        %s124 = sand.u32 %s26, 1
        %s125 = smul.addr %s124, 512
        %s126 = scalar_lea.vmem [#allocation2], %s125
        %p127 = pneg %p39
        %p128 = pneg %p36
        %p129 = pneg %p65
        %p130 = pneg %p62
        %s131 = sand.u32 %s52, 1
        %s132 = scalar_lea.sflag [#allocation4], %s131
        %s133 = sand.u32 %s52, 1
        %s134 = smul.addr %s133, 512
        %s135 = scalar_lea.vmem [#allocation5], %s134
        %s136 = smul.u32 8, %s18
        %s137 = smul.u32 8, %s18
        %v138 = vld [vmem:[%s117] sm:$0xff]
        %v139 = vld [vmem:[%s117 + $0x8] sm:$0xff]
        %v140 = vld [vmem:[%s117 + $0x10] sm:$0xff]
        %v141 = vld [vmem:[%s117 + $0x18] sm:$0xff]
        %v142 = vld [vmem:[%s117 + $0x20] sm:$0xff]
        %v143 = vld [vmem:[%s117 + $0x28] sm:$0xff]
        %v144 = vld [vmem:[%s117 + $0x30] sm:$0xff]
        %v145 = vld [vmem:[%s117 + $0x38] sm:$0xff]
        %v146 = vld [vmem:[%s117 + $0x40] sm:$0xff]
        %v147 = vld [vmem:[%s117 + $0x48] sm:$0xff]
        %v148 = vld [vmem:[%s117 + $0x50] sm:$0xff]
        %v149 = vld [vmem:[%s117 + $0x58] sm:$0xff]
        %v150 = vld [vmem:[%s117 + $0x60] sm:$0xff]
        %v151 = vld [vmem:[%s117 + $0x68] sm:$0xff]
        %v152 = vld [vmem:[%s117 + $0x70] sm:$0xff]
        %v153 = vld [vmem:[%s117 + $0x78] sm:$0xff]
        %v154 = vld [vmem:[%s117 + $0x80] sm:$0xff]
        %v155 = vld [vmem:[%s117 + $0x88] sm:$0xff]
        %v156 = vld [vmem:[%s117 + $0x90] sm:$0xff]
        %v157 = vld [vmem:[%s117 + $0x98] sm:$0xff]
        %v158 = vld [vmem:[%s117 + $0xa0] sm:$0xff]
        %v159 = vld [vmem:[%s117 + $0xa8] sm:$0xff]
        %v160 = vld [vmem:[%s117 + $0xb0] sm:$0xff]
        %v161 = vld [vmem:[%s117 + $0xb8] sm:$0xff]
        %v162 = vld [vmem:[%s117 + $0xc0] sm:$0xff]
        %v163 = vld [vmem:[%s117 + $0xc8] sm:$0xff]
        %v164 = vld [vmem:[%s117 + $0xd0] sm:$0xff]
        %v165 = vld [vmem:[%s117 + $0xd8] sm:$0xff]
        %v166 = vld [vmem:[%s117 + $0xe0] sm:$0xff]
        %v167 = vld [vmem:[%s117 + $0xe8] sm:$0xff]
        %v168 = vld [vmem:[%s117 + $0xf0] sm:$0xff]
        %v169 = vld [vmem:[%s117 + $0xf8] sm:$0xff]
        %v170 = vld [vmem:[%s117 + $0x100] sm:$0xff]
        %v171 = vld [vmem:[%s117 + $0x108] sm:$0xff]
        %v172 = vld [vmem:[%s117 + $0x110] sm:$0xff]
        %v173 = vld [vmem:[%s117 + $0x118] sm:$0xff]
        %v174 = vld [vmem:[%s117 + $0x120] sm:$0xff]
        %v175 = vld [vmem:[%s117 + $0x128] sm:$0xff]
        %v176 = vld [vmem:[%s117 + $0x130] sm:$0xff]
        %v177 = vld [vmem:[%s117 + $0x138] sm:$0xff]
        %v178 = vld [vmem:[%s117 + $0x140] sm:$0xff]
        %v179 = vld [vmem:[%s117 + $0x148] sm:$0xff]
        %v180 = vld [vmem:[%s117 + $0x150] sm:$0xff]
        %v181 = vld [vmem:[%s117 + $0x158] sm:$0xff]
        %v182 = vld [vmem:[%s117 + $0x160] sm:$0xff]
        %v183 = vld [vmem:[%s117 + $0x168] sm:$0xff]
        %v184 = vld [vmem:[%s117 + $0x170] sm:$0xff]
        %v185 = vld [vmem:[%s117 + $0x178] sm:$0xff]
        %v186 = vld [vmem:[%s117 + $0x180] sm:$0xff]
        %v187 = vld [vmem:[%s117 + $0x188] sm:$0xff]
        %v188 = vld [vmem:[%s117 + $0x190] sm:$0xff]
        %v189 = vld [vmem:[%s117 + $0x198] sm:$0xff]
        %v190 = vld [vmem:[%s117 + $0x1a0] sm:$0xff]
        %v191 = vld [vmem:[%s117 + $0x1a8] sm:$0xff]
        %v192 = vld [vmem:[%s117 + $0x1b0] sm:$0xff]
        %v193 = vld [vmem:[%s117 + $0x1b8] sm:$0xff]
        %v194 = vld [vmem:[%s117 + $0x1c0] sm:$0xff]
        %v195 = vld [vmem:[%s117 + $0x1c8] sm:$0xff]
        %v196 = vld [vmem:[%s117 + $0x1d0] sm:$0xff]
        %v197 = vld [vmem:[%s117 + $0x1d8] sm:$0xff]
        %v198 = vld [vmem:[%s117 + $0x1e0] sm:$0xff]
        %v199 = vld [vmem:[%s117 + $0x1e8] sm:$0xff]
        %v200 = vld [vmem:[%s117 + $0x1f0] sm:$0xff]
        %v201 = vld [vmem:[%s117 + $0x1f8] sm:$0xff]
        %v202 = vmul.f32 %v138, 0.31415927
        %v203 = vmul.f32 %v139, 0.31415927
        %v204 = vmul.f32 %v140, 0.31415927
        %v205 = vmul.f32 %v141, 0.31415927
        %v206 = vmul.f32 %v142, 0.31415927
        %v207 = vmul.f32 %v143, 0.31415927
        %v208 = vmul.f32 %v144, 0.31415927
        %v209 = vmul.f32 %v145, 0.31415927
        %v210 = vmul.f32 %v146, 0.31415927
        %v211 = vmul.f32 %v147, 0.31415927
        %v212 = vmul.f32 %v148, 0.31415927
        %v213 = vmul.f32 %v149, 0.31415927
        %v214 = vmul.f32 %v150, 0.31415927
        %v215 = vmul.f32 %v151, 0.31415927
        %v216 = vmul.f32 %v152, 0.31415927
        %v217 = vmul.f32 %v153, 0.31415927
        %v218 = vmul.f32 %v154, 0.31415927
        %v219 = vmul.f32 %v155, 0.31415927
        %v220 = vmul.f32 %v156, 0.31415927
        %v221 = vmul.f32 %v157, 0.31415927
        %v222 = vmul.f32 %v158, 0.31415927
        %v223 = vmul.f32 %v159, 0.31415927
        %v224 = vmul.f32 %v160, 0.31415927
        %v225 = vmul.f32 %v161, 0.31415927
        %v226 = vmul.f32 %v162, 0.31415927
        %v227 = vmul.f32 %v163, 0.31415927
        %v228 = vmul.f32 %v164, 0.31415927
        %v229 = vmul.f32 %v165, 0.31415927
        %v230 = vmul.f32 %v166, 0.31415927
        %v231 = vmul.f32 %v167, 0.31415927
        %v232 = vmul.f32 %v168, 0.31415927
        %v233 = vmul.f32 %v169, 0.31415927
        %v234 = vmul.f32 %v170, 0.31415927
        %v235 = vmul.f32 %v171, 0.31415927
        %v236 = vmul.f32 %v172, 0.31415927
        %v237 = vmul.f32 %v173, 0.31415927
        %v238 = vmul.f32 %v174, 0.31415927
        %v239 = vmul.f32 %v175, 0.31415927
        %v240 = vmul.f32 %v176, 0.31415927
        %v241 = vmul.f32 %v177, 0.31415927
        %v242 = vmul.f32 %v178, 0.31415927
        %v243 = vmul.f32 %v179, 0.31415927
        %v244 = vmul.f32 %v180, 0.31415927
        %v245 = vmul.f32 %v181, 0.31415927
        %v246 = vmul.f32 %v182, 0.31415927
        %v247 = vmul.f32 %v183, 0.31415927
        %v248 = vmul.f32 %v184, 0.31415927
        %v249 = vmul.f32 %v185, 0.31415927
        %v250 = vmul.f32 %v186, 0.31415927
        %v251 = vmul.f32 %v187, 0.31415927
        %v252 = vmul.f32 %v188, 0.31415927
        %v253 = vmul.f32 %v189, 0.31415927
        %v254 = vmul.f32 %v190, 0.31415927
        %v255 = vmul.f32 %v191, 0.31415927
        %v256 = vmul.f32 %v192, 0.31415927
        %v257 = vmul.f32 %v193, 0.31415927
        %v258 = vmul.f32 %v194, 0.31415927
        %v259 = vmul.f32 %v195, 0.31415927
        %v260 = vmul.f32 %v196, 0.31415927
        %v261 = vmul.f32 %v197, 0.31415927
        %v262 = vmul.f32 %v198, 0.31415927
        %v263 = vmul.f32 %v199, 0.31415927
        %v264 = vmul.f32 %v200, 0.31415927
        %v265 = vmul.f32 %v201, 0.31415927
        %v266 = vmul.f32 %v202, %v202
        %v267 = vmul.f32 %v203, %v203
        %v268 = vmul.f32 %v204, %v204
        %v269 = vmul.f32 %v205, %v205
        %v270 = vmul.f32 %v206, %v206
        %v271 = vmul.f32 %v207, %v207
        %v272 = vmul.f32 %v208, %v208
        %v273 = vmul.f32 %v209, %v209
        %v274 = vmul.f32 %v210, %v210
        %v275 = vmul.f32 %v211, %v211
        %v276 = vmul.f32 %v212, %v212
        %v277 = vmul.f32 %v213, %v213
        %v278 = vmul.f32 %v214, %v214
        %v279 = vmul.f32 %v215, %v215
        %v280 = vmul.f32 %v216, %v216
        %v281 = vmul.f32 %v217, %v217
        %v282 = vmul.f32 %v218, %v218
        %v283 = vmul.f32 %v219, %v219
        %v284 = vmul.f32 %v220, %v220
        %v285 = vmul.f32 %v221, %v221
        %v286 = vmul.f32 %v222, %v222
        %v287 = vmul.f32 %v223, %v223
        %v288 = vmul.f32 %v224, %v224
        %v289 = vmul.f32 %v225, %v225
        %v290 = vmul.f32 %v226, %v226
        %v291 = vmul.f32 %v227, %v227
        %v292 = vmul.f32 %v228, %v228
        %v293 = vmul.f32 %v229, %v229
        %v294 = vmul.f32 %v230, %v230
        %v295 = vmul.f32 %v231, %v231
        %v296 = vmul.f32 %v232, %v232
        %v297 = vmul.f32 %v233, %v233
        %v298 = vmul.f32 %v234, %v234
        %v299 = vmul.f32 %v235, %v235
        %v300 = vmul.f32 %v236, %v236
        %v301 = vmul.f32 %v237, %v237
        %v302 = vmul.f32 %v238, %v238
        %v303 = vmul.f32 %v239, %v239
        %v304 = vmul.f32 %v240, %v240
        %v305 = vmul.f32 %v241, %v241
        %v306 = vmul.f32 %v242, %v242
        %v307 = vmul.f32 %v243, %v243
        %v308 = vmul.f32 %v244, %v244
        %v309 = vmul.f32 %v245, %v245
        %v310 = vmul.f32 %v246, %v246
        %v311 = vmul.f32 %v247, %v247
        %v312 = vmul.f32 %v248, %v248
        %v313 = vmul.f32 %v249, %v249
        %v314 = vmul.f32 %v250, %v250
        %v315 = vmul.f32 %v251, %v251
        %v316 = vmul.f32 %v252, %v252
        %v317 = vmul.f32 %v253, %v253
        %v318 = vmul.f32 %v254, %v254
        %v319 = vmul.f32 %v255, %v255
        %v320 = vmul.f32 %v256, %v256
        %v321 = vmul.f32 %v257, %v257
        %v322 = vmul.f32 %v258, %v258
        %v323 = vmul.f32 %v259, %v259
        %v324 = vmul.f32 %v260, %v260
        %v325 = vmul.f32 %v261, %v261
        %v326 = vmul.f32 %v262, %v262
        %v327 = vmul.f32 %v263, %v263
        %v328 = vmul.f32 %v264, %v264
        %v329 = vmul.f32 %v265, %v265
        %v330 = vmul.f32 %v266, -2.5052108e-08
        %v331 = vmul.f32 %v267, -2.5052108e-08
        %v332 = vmul.f32 %v268, -2.5052108e-08
        %v333 = vmul.f32 %v269, -2.5052108e-08
        %v334 = vmul.f32 %v270, -2.5052108e-08
        %v335 = vmul.f32 %v271, -2.5052108e-08
        %v336 = vmul.f32 %v272, -2.5052108e-08
        %v337 = vmul.f32 %v273, -2.5052108e-08
        %v338 = vmul.f32 %v274, -2.5052108e-08
        %v339 = vmul.f32 %v275, -2.5052108e-08
        %v340 = vmul.f32 %v276, -2.5052108e-08
        %v341 = vmul.f32 %v277, -2.5052108e-08
        %v342 = vmul.f32 %v278, -2.5052108e-08
        %v343 = vmul.f32 %v279, -2.5052108e-08
        %v344 = vmul.f32 %v280, -2.5052108e-08
        %v345 = vmul.f32 %v281, -2.5052108e-08
        %v346 = vmul.f32 %v282, -2.5052108e-08
        %v347 = vmul.f32 %v283, -2.5052108e-08
        %v348 = vmul.f32 %v284, -2.5052108e-08
        %v349 = vmul.f32 %v285, -2.5052108e-08
        %v350 = vmul.f32 %v286, -2.5052108e-08
        %v351 = vmul.f32 %v287, -2.5052108e-08
        %v352 = vmul.f32 %v288, -2.5052108e-08
        %v353 = vmul.f32 %v289, -2.5052108e-08
        %v354 = vmul.f32 %v290, -2.5052108e-08
        %v355 = vmul.f32 %v291, -2.5052108e-08
        %v356 = vmul.f32 %v292, -2.5052108e-08
        %v357 = vmul.f32 %v293, -2.5052108e-08
        %v358 = vmul.f32 %v294, -2.5052108e-08
        %v359 = vmul.f32 %v295, -2.5052108e-08
        %v360 = vmul.f32 %v296, -2.5052108e-08
        %v361 = vmul.f32 %v297, -2.5052108e-08
        %v362 = vmul.f32 %v298, -2.5052108e-08
        %v363 = vmul.f32 %v299, -2.5052108e-08
        %v364 = vmul.f32 %v300, -2.5052108e-08
        %v365 = vmul.f32 %v301, -2.5052108e-08
        %v366 = vmul.f32 %v302, -2.5052108e-08
        %v367 = vmul.f32 %v303, -2.5052108e-08
        %v368 = vmul.f32 %v304, -2.5052108e-08
        %v369 = vmul.f32 %v305, -2.5052108e-08
        %v370 = vmul.f32 %v306, -2.5052108e-08
        %v371 = vmul.f32 %v307, -2.5052108e-08
        %v372 = vmul.f32 %v308, -2.5052108e-08
        %v373 = vmul.f32 %v309, -2.5052108e-08
        %v374 = vmul.f32 %v310, -2.5052108e-08
        %v375 = vmul.f32 %v311, -2.5052108e-08
        %v376 = vmul.f32 %v312, -2.5052108e-08
        %v377 = vmul.f32 %v313, -2.5052108e-08
        %v378 = vmul.f32 %v314, -2.5052108e-08
        %v379 = vmul.f32 %v315, -2.5052108e-08
        %v380 = vmul.f32 %v316, -2.5052108e-08
        %v381 = vmul.f32 %v317, -2.5052108e-08
        %v382 = vmul.f32 %v318, -2.5052108e-08
        %v383 = vmul.f32 %v319, -2.5052108e-08
        %v384 = vmul.f32 %v320, -2.5052108e-08
        %v385 = vmul.f32 %v321, -2.5052108e-08
        %v386 = vmul.f32 %v322, -2.5052108e-08
        %v387 = vmul.f32 %v323, -2.5052108e-08
        %v388 = vmul.f32 %v324, -2.5052108e-08
        %v389 = vmul.f32 %v325, -2.5052108e-08
        %v390 = vmul.f32 %v326, -2.5052108e-08
        %v391 = vmul.f32 %v327, -2.5052108e-08
        %v392 = vmul.f32 %v328, -2.5052108e-08
        %v393 = vmul.f32 %v329, -2.5052108e-08
        %v394 = vadd.f32 %v330, 2.7557319e-06
        %v395 = vadd.f32 %v331, 2.7557319e-06
        %v396 = vadd.f32 %v332, 2.7557319e-06
        %v397 = vadd.f32 %v333, 2.7557319e-06
        %v398 = vadd.f32 %v334, 2.7557319e-06
        %v399 = vadd.f32 %v335, 2.7557319e-06
        %v400 = vadd.f32 %v336, 2.7557319e-06
        %v401 = vadd.f32 %v337, 2.7557319e-06
        %v402 = vadd.f32 %v338, 2.7557319e-06
        %v403 = vadd.f32 %v339, 2.7557319e-06
        %v404 = vadd.f32 %v340, 2.7557319e-06
        %v405 = vadd.f32 %v341, 2.7557319e-06
        %v406 = vadd.f32 %v342, 2.7557319e-06
        %v407 = vadd.f32 %v343, 2.7557319e-06
        %v408 = vadd.f32 %v344, 2.7557319e-06
        %v409 = vadd.f32 %v345, 2.7557319e-06
        %v410 = vadd.f32 %v346, 2.7557319e-06
        %v411 = vadd.f32 %v347, 2.7557319e-06
        %v412 = vadd.f32 %v348, 2.7557319e-06
        %v413 = vadd.f32 %v349, 2.7557319e-06
        %v414 = vadd.f32 %v350, 2.7557319e-06
        %v415 = vadd.f32 %v351, 2.7557319e-06
        %v416 = vadd.f32 %v352, 2.7557319e-06
        %v417 = vadd.f32 %v353, 2.7557319e-06
        %v418 = vadd.f32 %v354, 2.7557319e-06
        %v419 = vadd.f32 %v355, 2.7557319e-06
        %v420 = vadd.f32 %v356, 2.7557319e-06
        %v421 = vadd.f32 %v357, 2.7557319e-06
        %v422 = vadd.f32 %v358, 2.7557319e-06
        %v423 = vadd.f32 %v359, 2.7557319e-06
        %v424 = vadd.f32 %v360, 2.7557319e-06
        %v425 = vadd.f32 %v361, 2.7557319e-06
        %v426 = vadd.f32 %v362, 2.7557319e-06
        %v427 = vadd.f32 %v363, 2.7557319e-06
        %v428 = vadd.f32 %v364, 2.7557319e-06
        %v429 = vadd.f32 %v365, 2.7557319e-06
        %v430 = vadd.f32 %v366, 2.7557319e-06
        %v431 = vadd.f32 %v367, 2.7557319e-06
        %v432 = vadd.f32 %v368, 2.7557319e-06
        %v433 = vadd.f32 %v369, 2.7557319e-06
        %v434 = vadd.f32 %v370, 2.7557319e-06
        %v435 = vadd.f32 %v371, 2.7557319e-06
        %v436 = vadd.f32 %v372, 2.7557319e-06
        %v437 = vadd.f32 %v373, 2.7557319e-06
        %v438 = vadd.f32 %v374, 2.7557319e-06
        %v439 = vadd.f32 %v375, 2.7557319e-06
        %v440 = vadd.f32 %v376, 2.7557319e-06
        %v441 = vadd.f32 %v377, 2.7557319e-06
        %v442 = vadd.f32 %v378, 2.7557319e-06
        %v443 = vadd.f32 %v379, 2.7557319e-06
        %v444 = vadd.f32 %v380, 2.7557319e-06
        %v445 = vadd.f32 %v381, 2.7557319e-06
        %v446 = vadd.f32 %v382, 2.7557319e-06
        %v447 = vadd.f32 %v383, 2.7557319e-06
        %v448 = vadd.f32 %v384, 2.7557319e-06
        %v449 = vadd.f32 %v385, 2.7557319e-06
        %v450 = vadd.f32 %v386, 2.7557319e-06
        %v451 = vadd.f32 %v387, 2.7557319e-06
        %v452 = vadd.f32 %v388, 2.7557319e-06
        %v453 = vadd.f32 %v389, 2.7557319e-06
        %v454 = vadd.f32 %v390, 2.7557319e-06
        %v455 = vadd.f32 %v391, 2.7557319e-06
        %v456 = vadd.f32 %v392, 2.7557319e-06
        %v457 = vadd.f32 %v393, 2.7557319e-06
        %v458 = vmul.f32 %v394, %v266
        %v459 = vmul.f32 %v395, %v267
        %v460 = vmul.f32 %v396, %v268
        %v461 = vmul.f32 %v397, %v269
        %v462 = vmul.f32 %v398, %v270
        %v463 = vmul.f32 %v399, %v271
        %v464 = vmul.f32 %v400, %v272
        %v465 = vmul.f32 %v401, %v273
        %v466 = vmul.f32 %v402, %v274
        %v467 = vmul.f32 %v403, %v275
        %v468 = vmul.f32 %v404, %v276
        %v469 = vmul.f32 %v405, %v277
        %v470 = vmul.f32 %v406, %v278
        %v471 = vmul.f32 %v407, %v279
        %v472 = vmul.f32 %v408, %v280
        %v473 = vmul.f32 %v409, %v281
        %v474 = vmul.f32 %v410, %v282
        %v475 = vmul.f32 %v411, %v283
        %v476 = vmul.f32 %v412, %v284
        %v477 = vmul.f32 %v413, %v285
        %v478 = vmul.f32 %v414, %v286
        %v479 = vmul.f32 %v415, %v287
        %v480 = vmul.f32 %v416, %v288
        %v481 = vmul.f32 %v417, %v289
        %v482 = vmul.f32 %v418, %v290
        %v483 = vmul.f32 %v419, %v291
        %v484 = vmul.f32 %v420, %v292
        %v485 = vmul.f32 %v421, %v293
        %v486 = vmul.f32 %v422, %v294
        %v487 = vmul.f32 %v423, %v295
        %v488 = vmul.f32 %v424, %v296
        %v489 = vmul.f32 %v425, %v297
        %v490 = vmul.f32 %v426, %v298
        %v491 = vmul.f32 %v427, %v299
        %v492 = vmul.f32 %v428, %v300
        %v493 = vmul.f32 %v429, %v301
        %v494 = vmul.f32 %v430, %v302
        %v495 = vmul.f32 %v431, %v303
        %v496 = vmul.f32 %v432, %v304
        %v497 = vmul.f32 %v433, %v305
        %v498 = vmul.f32 %v434, %v306
        %v499 = vmul.f32 %v435, %v307
        %v500 = vmul.f32 %v436, %v308
        %v501 = vmul.f32 %v437, %v309
        %v502 = vmul.f32 %v438, %v310
        %v503 = vmul.f32 %v439, %v311
        %v504 = vmul.f32 %v440, %v312
        %v505 = vmul.f32 %v441, %v313
        %v506 = vmul.f32 %v442, %v314
        %v507 = vmul.f32 %v443, %v315
        %v508 = vmul.f32 %v444, %v316
        %v509 = vmul.f32 %v445, %v317
        %v510 = vmul.f32 %v446, %v318
        %v511 = vmul.f32 %v447, %v319
        %v512 = vmul.f32 %v448, %v320
        %v513 = vmul.f32 %v449, %v321
        %v514 = vmul.f32 %v450, %v322
        %v515 = vmul.f32 %v451, %v323
        %v516 = vmul.f32 %v452, %v324
        %v517 = vmul.f32 %v453, %v325
        %v518 = vmul.f32 %v454, %v326
        %v519 = vmul.f32 %v455, %v327
        %v520 = vmul.f32 %v456, %v328
        %v521 = vmul.f32 %v457, %v329
        %v522 = vsub.f32 %v458, 0.0001984127
        %v523 = vsub.f32 %v459, 0.0001984127
        %v524 = vsub.f32 %v460, 0.0001984127
        %v525 = vsub.f32 %v461, 0.0001984127
        %v526 = vsub.f32 %v462, 0.0001984127
        %v527 = vsub.f32 %v463, 0.0001984127
        %v528 = vsub.f32 %v464, 0.0001984127
        %v529 = vsub.f32 %v465, 0.0001984127
        %v530 = vsub.f32 %v466, 0.0001984127
        %v531 = vsub.f32 %v467, 0.0001984127
        %v532 = vsub.f32 %v468, 0.0001984127
        %v533 = vsub.f32 %v469, 0.0001984127
        %v534 = vsub.f32 %v470, 0.0001984127
        %v535 = vsub.f32 %v471, 0.0001984127
        %v536 = vsub.f32 %v472, 0.0001984127
        %v537 = vsub.f32 %v473, 0.0001984127
        %v538 = vsub.f32 %v474, 0.0001984127
        %v539 = vsub.f32 %v475, 0.0001984127
        %v540 = vsub.f32 %v476, 0.0001984127
        %v541 = vsub.f32 %v477, 0.0001984127
        %v542 = vsub.f32 %v478, 0.0001984127
        %v543 = vsub.f32 %v479, 0.0001984127
        %v544 = vsub.f32 %v480, 0.0001984127
        %v545 = vsub.f32 %v481, 0.0001984127
        %v546 = vsub.f32 %v482, 0.0001984127
        %v547 = vsub.f32 %v483, 0.0001984127
        %v548 = vsub.f32 %v484, 0.0001984127
        %v549 = vsub.f32 %v485, 0.0001984127
        %v550 = vsub.f32 %v486, 0.0001984127
        %v551 = vsub.f32 %v487, 0.0001984127
        %v552 = vsub.f32 %v488, 0.0001984127
        %v553 = vsub.f32 %v489, 0.0001984127
        %v554 = vsub.f32 %v490, 0.0001984127
        %v555 = vsub.f32 %v491, 0.0001984127
        %v556 = vsub.f32 %v492, 0.0001984127
        %v557 = vsub.f32 %v493, 0.0001984127
        %v558 = vsub.f32 %v494, 0.0001984127
        %v559 = vsub.f32 %v495, 0.0001984127
        %v560 = vsub.f32 %v496, 0.0001984127
        %v561 = vsub.f32 %v497, 0.0001984127
        %v562 = vsub.f32 %v498, 0.0001984127
        %v563 = vsub.f32 %v499, 0.0001984127
        %v564 = vsub.f32 %v500, 0.0001984127
        %v565 = vsub.f32 %v501, 0.0001984127
        %v566 = vsub.f32 %v502, 0.0001984127
        %v567 = vsub.f32 %v503, 0.0001984127
        %v568 = vsub.f32 %v504, 0.0001984127
        %v569 = vsub.f32 %v505, 0.0001984127
        %v570 = vsub.f32 %v506, 0.0001984127
        %v571 = vsub.f32 %v507, 0.0001984127
        %v572 = vsub.f32 %v508, 0.0001984127
        %v573 = vsub.f32 %v509, 0.0001984127
        %v574 = vsub.f32 %v510, 0.0001984127
        %v575 = vsub.f32 %v511, 0.0001984127
        %v576 = vsub.f32 %v512, 0.0001984127
        %v577 = vsub.f32 %v513, 0.0001984127
        %v578 = vsub.f32 %v514, 0.0001984127
        %v579 = vsub.f32 %v515, 0.0001984127
        %v580 = vsub.f32 %v516, 0.0001984127
        %v581 = vsub.f32 %v517, 0.0001984127
        %v582 = vsub.f32 %v518, 0.0001984127
        %v583 = vsub.f32 %v519, 0.0001984127
        %v584 = vsub.f32 %v520, 0.0001984127
        %v585 = vsub.f32 %v521, 0.0001984127
        %v586 = vmul.f32 %v522, %v266
        %v587 = vmul.f32 %v523, %v267
        %v588 = vmul.f32 %v524, %v268
        %v589 = vmul.f32 %v525, %v269
        %v590 = vmul.f32 %v526, %v270
        %v591 = vmul.f32 %v527, %v271
        %v592 = vmul.f32 %v528, %v272
        %v593 = vmul.f32 %v529, %v273
        %v594 = vmul.f32 %v530, %v274
        %v595 = vmul.f32 %v531, %v275
        %v596 = vmul.f32 %v532, %v276
        %v597 = vmul.f32 %v533, %v277
        %v598 = vmul.f32 %v534, %v278
        %v599 = vmul.f32 %v535, %v279
        %v600 = vmul.f32 %v536, %v280
        %v601 = vmul.f32 %v537, %v281
        %v602 = vmul.f32 %v538, %v282
        %v603 = vmul.f32 %v539, %v283
        %v604 = vmul.f32 %v540, %v284
        %v605 = vmul.f32 %v541, %v285
        %v606 = vmul.f32 %v542, %v286
        %v607 = vmul.f32 %v543, %v287
        %v608 = vmul.f32 %v544, %v288
        %v609 = vmul.f32 %v545, %v289
        %v610 = vmul.f32 %v546, %v290
        %v611 = vmul.f32 %v547, %v291
        %v612 = vmul.f32 %v548, %v292
        %v613 = vmul.f32 %v549, %v293
        %v614 = vmul.f32 %v550, %v294
        %v615 = vmul.f32 %v551, %v295
        %v616 = vmul.f32 %v552, %v296
        %v617 = vmul.f32 %v553, %v297
        %v618 = vmul.f32 %v554, %v298
        %v619 = vmul.f32 %v555, %v299
        %v620 = vmul.f32 %v556, %v300
        %v621 = vmul.f32 %v557, %v301
        %v622 = vmul.f32 %v558, %v302
        %v623 = vmul.f32 %v559, %v303
        %v624 = vmul.f32 %v560, %v304
        %v625 = vmul.f32 %v561, %v305
        %v626 = vmul.f32 %v562, %v306
        %v627 = vmul.f32 %v563, %v307
        %v628 = vmul.f32 %v564, %v308
        %v629 = vmul.f32 %v565, %v309
        %v630 = vmul.f32 %v566, %v310
        %v631 = vmul.f32 %v567, %v311
        %v632 = vmul.f32 %v568, %v312
        %v633 = vmul.f32 %v569, %v313
        %v634 = vmul.f32 %v570, %v314
        %v635 = vmul.f32 %v571, %v315
        %v636 = vmul.f32 %v572, %v316
        %v637 = vmul.f32 %v573, %v317
        %v638 = vmul.f32 %v574, %v318
        %v639 = vmul.f32 %v575, %v319
        %v640 = vmul.f32 %v576, %v320
        %v641 = vmul.f32 %v577, %v321
        %v642 = vmul.f32 %v578, %v322
        %v643 = vmul.f32 %v579, %v323
        %v644 = vmul.f32 %v580, %v324
        %v645 = vmul.f32 %v581, %v325
        %v646 = vmul.f32 %v582, %v326
        %v647 = vmul.f32 %v583, %v327
        %v648 = vmul.f32 %v584, %v328
        %v649 = vmul.f32 %v585, %v329
        %v650 = vadd.f32 %v586, 0.008333333
        %v651 = vadd.f32 %v587, 0.008333333
        %v652 = vadd.f32 %v588, 0.008333333
        %v653 = vadd.f32 %v589, 0.008333333
        %v654 = vadd.f32 %v590, 0.008333333
        %v655 = vadd.f32 %v591, 0.008333333
        %v656 = vadd.f32 %v592, 0.008333333
        %v657 = vadd.f32 %v593, 0.008333333
        %v658 = vadd.f32 %v594, 0.008333333
        %v659 = vadd.f32 %v595, 0.008333333
        %v660 = vadd.f32 %v596, 0.008333333
        %v661 = vadd.f32 %v597, 0.008333333
        %v662 = vadd.f32 %v598, 0.008333333
        %v663 = vadd.f32 %v599, 0.008333333
        %v664 = vadd.f32 %v600, 0.008333333
        %v665 = vadd.f32 %v601, 0.008333333
        %v666 = vadd.f32 %v602, 0.008333333
        %v667 = vadd.f32 %v603, 0.008333333
        %v668 = vadd.f32 %v604, 0.008333333
        %v669 = vadd.f32 %v605, 0.008333333
        %v670 = vadd.f32 %v606, 0.008333333
        %v671 = vadd.f32 %v607, 0.008333333
        %v672 = vadd.f32 %v608, 0.008333333
        %v673 = vadd.f32 %v609, 0.008333333
        %v674 = vadd.f32 %v610, 0.008333333
        %v675 = vadd.f32 %v611, 0.008333333
        %v676 = vadd.f32 %v612, 0.008333333
        %v677 = vadd.f32 %v613, 0.008333333
        %v678 = vadd.f32 %v614, 0.008333333
        %v679 = vadd.f32 %v615, 0.008333333
        %v680 = vadd.f32 %v616, 0.008333333
        %v681 = vadd.f32 %v617, 0.008333333
        %v682 = vadd.f32 %v618, 0.008333333
        %v683 = vadd.f32 %v619, 0.008333333
        %v684 = vadd.f32 %v620, 0.008333333
        %v685 = vadd.f32 %v621, 0.008333333
        %v686 = vadd.f32 %v622, 0.008333333
        %v687 = vadd.f32 %v623, 0.008333333
        %v688 = vadd.f32 %v624, 0.008333333
        %v689 = vadd.f32 %v625, 0.008333333
        %v690 = vadd.f32 %v626, 0.008333333
        %v691 = vadd.f32 %v627, 0.008333333
        %v692 = vadd.f32 %v628, 0.008333333
        %v693 = vadd.f32 %v629, 0.008333333
        %v694 = vadd.f32 %v630, 0.008333333
        %v695 = vadd.f32 %v631, 0.008333333
        %v696 = vadd.f32 %v632, 0.008333333
        %v697 = vadd.f32 %v633, 0.008333333
        %v698 = vadd.f32 %v634, 0.008333333
        %v699 = vadd.f32 %v635, 0.008333333
        %v700 = vadd.f32 %v636, 0.008333333
        %v701 = vadd.f32 %v637, 0.008333333
        %v702 = vadd.f32 %v638, 0.008333333
        %v703 = vadd.f32 %v639, 0.008333333
        %v704 = vadd.f32 %v640, 0.008333333
        %v705 = vadd.f32 %v641, 0.008333333
        %v706 = vadd.f32 %v642, 0.008333333
        %v707 = vadd.f32 %v643, 0.008333333
        %v708 = vadd.f32 %v644, 0.008333333
        %v709 = vadd.f32 %v645, 0.008333333
        %v710 = vadd.f32 %v646, 0.008333333
        %v711 = vadd.f32 %v647, 0.008333333
        %v712 = vadd.f32 %v648, 0.008333333
        %v713 = vadd.f32 %v649, 0.008333333
        %v714 = vmul.f32 %v650, %v266
        %v715 = vmul.f32 %v651, %v267
        %v716 = vmul.f32 %v652, %v268
        %v717 = vmul.f32 %v653, %v269
        %v718 = vmul.f32 %v654, %v270
        %v719 = vmul.f32 %v655, %v271
        %v720 = vmul.f32 %v656, %v272
        %v721 = vmul.f32 %v657, %v273
        %v722 = vmul.f32 %v658, %v274
        %v723 = vmul.f32 %v659, %v275
        %v724 = vmul.f32 %v660, %v276
        %v725 = vmul.f32 %v661, %v277
        %v726 = vmul.f32 %v662, %v278
        %v727 = vmul.f32 %v663, %v279
        %v728 = vmul.f32 %v664, %v280
        %v729 = vmul.f32 %v665, %v281
        %v730 = vmul.f32 %v666, %v282
        %v731 = vmul.f32 %v667, %v283
        %v732 = vmul.f32 %v668, %v284
        %v733 = vmul.f32 %v669, %v285
        %v734 = vmul.f32 %v670, %v286
        %v735 = vmul.f32 %v671, %v287
        %v736 = vmul.f32 %v672, %v288
        %v737 = vmul.f32 %v673, %v289
        %v738 = vmul.f32 %v674, %v290
        %v739 = vmul.f32 %v675, %v291
        %v740 = vmul.f32 %v676, %v292
        %v741 = vmul.f32 %v677, %v293
        %v742 = vmul.f32 %v678, %v294
        %v743 = vmul.f32 %v679, %v295
        %v744 = vmul.f32 %v680, %v296
        %v745 = vmul.f32 %v681, %v297
        %v746 = vmul.f32 %v682, %v298
        %v747 = vmul.f32 %v683, %v299
        %v748 = vmul.f32 %v684, %v300
        %v749 = vmul.f32 %v685, %v301
        %v750 = vmul.f32 %v686, %v302
        %v751 = vmul.f32 %v687, %v303
        %v752 = vmul.f32 %v688, %v304
        %v753 = vmul.f32 %v689, %v305
        %v754 = vmul.f32 %v690, %v306
        %v755 = vmul.f32 %v691, %v307
        %v756 = vmul.f32 %v692, %v308
        %v757 = vmul.f32 %v693, %v309
        %v758 = vmul.f32 %v694, %v310
        %v759 = vmul.f32 %v695, %v311
        %v760 = vmul.f32 %v696, %v312
        %v761 = vmul.f32 %v697, %v313
        %v762 = vmul.f32 %v698, %v314
        %v763 = vmul.f32 %v699, %v315
        %v764 = vmul.f32 %v700, %v316
        %v765 = vmul.f32 %v701, %v317
        %v766 = vmul.f32 %v702, %v318
        %v767 = vmul.f32 %v703, %v319
        %v768 = vmul.f32 %v704, %v320
        %v769 = vmul.f32 %v705, %v321
        %v770 = vmul.f32 %v706, %v322
        %v771 = vmul.f32 %v707, %v323
        %v772 = vmul.f32 %v708, %v324
        %v773 = vmul.f32 %v709, %v325
        %v774 = vmul.f32 %v710, %v326
        %v775 = vmul.f32 %v711, %v327
        %v776 = vmul.f32 %v712, %v328
        %v777 = vmul.f32 %v713, %v329
        %v778 = vsub.f32 %v714, 0.16666667
        %v779 = vsub.f32 %v715, 0.16666667
        %v780 = vsub.f32 %v716, 0.16666667
        %v781 = vsub.f32 %v717, 0.16666667
        %v782 = vsub.f32 %v718, 0.16666667
        %v783 = vsub.f32 %v719, 0.16666667
        %v784 = vsub.f32 %v720, 0.16666667
        %v785 = vsub.f32 %v721, 0.16666667
        %v786 = vsub.f32 %v722, 0.16666667
        %v787 = vsub.f32 %v723, 0.16666667
        %v788 = vsub.f32 %v724, 0.16666667
        %v789 = vsub.f32 %v725, 0.16666667
        %v790 = vsub.f32 %v726, 0.16666667
        %v791 = vsub.f32 %v727, 0.16666667
        %v792 = vsub.f32 %v728, 0.16666667
        %v793 = vsub.f32 %v729, 0.16666667
        %v794 = vsub.f32 %v730, 0.16666667
        %v795 = vsub.f32 %v731, 0.16666667
        %v796 = vsub.f32 %v732, 0.16666667
        %v797 = vsub.f32 %v733, 0.16666667
        %v798 = vsub.f32 %v734, 0.16666667
        %v799 = vsub.f32 %v735, 0.16666667
        %v800 = vsub.f32 %v736, 0.16666667
        %v801 = vsub.f32 %v737, 0.16666667
        %v802 = vsub.f32 %v738, 0.16666667
        %v803 = vsub.f32 %v739, 0.16666667
        %v804 = vsub.f32 %v740, 0.16666667
        %v805 = vsub.f32 %v741, 0.16666667
        %v806 = vsub.f32 %v742, 0.16666667
        %v807 = vsub.f32 %v743, 0.16666667
        %v808 = vsub.f32 %v744, 0.16666667
        %v809 = vsub.f32 %v745, 0.16666667
        %v810 = vsub.f32 %v746, 0.16666667
        %v811 = vsub.f32 %v747, 0.16666667
        %v812 = vsub.f32 %v748, 0.16666667
        %v813 = vsub.f32 %v749, 0.16666667
        %v814 = vsub.f32 %v750, 0.16666667
        %v815 = vsub.f32 %v751, 0.16666667
        %v816 = vsub.f32 %v752, 0.16666667
        %v817 = vsub.f32 %v753, 0.16666667
        %v818 = vsub.f32 %v754, 0.16666667
        %v819 = vsub.f32 %v755, 0.16666667
        %v820 = vsub.f32 %v756, 0.16666667
        %v821 = vsub.f32 %v757, 0.16666667
        %v822 = vsub.f32 %v758, 0.16666667
        %v823 = vsub.f32 %v759, 0.16666667
        %v824 = vsub.f32 %v760, 0.16666667
        %v825 = vsub.f32 %v761, 0.16666667
        %v826 = vsub.f32 %v762, 0.16666667
        %v827 = vsub.f32 %v763, 0.16666667
        %v828 = vsub.f32 %v764, 0.16666667
        %v829 = vsub.f32 %v765, 0.16666667
        %v830 = vsub.f32 %v766, 0.16666667
        %v831 = vsub.f32 %v767, 0.16666667
        %v832 = vsub.f32 %v768, 0.16666667
        %v833 = vsub.f32 %v769, 0.16666667
        %v834 = vsub.f32 %v770, 0.16666667
        %v835 = vsub.f32 %v771, 0.16666667
        %v836 = vsub.f32 %v772, 0.16666667
        %v837 = vsub.f32 %v773, 0.16666667
        %v838 = vsub.f32 %v774, 0.16666667
        %v839 = vsub.f32 %v775, 0.16666667
        %v840 = vsub.f32 %v776, 0.16666667
        %v841 = vsub.f32 %v777, 0.16666667
        %v842 = vmul.f32 %v778, %v266
        %v843 = vmul.f32 %v779, %v267
        %v844 = vmul.f32 %v780, %v268
        %v845 = vmul.f32 %v781, %v269
        %v846 = vmul.f32 %v782, %v270
        %v847 = vmul.f32 %v783, %v271
        %v848 = vmul.f32 %v784, %v272
        %v849 = vmul.f32 %v785, %v273
        %v850 = vmul.f32 %v786, %v274
        %v851 = vmul.f32 %v787, %v275
        %v852 = vmul.f32 %v788, %v276
        %v853 = vmul.f32 %v789, %v277
        %v854 = vmul.f32 %v790, %v278
        %v855 = vmul.f32 %v791, %v279
        %v856 = vmul.f32 %v792, %v280
        %v857 = vmul.f32 %v793, %v281
        %v858 = vmul.f32 %v794, %v282
        %v859 = vmul.f32 %v795, %v283
        %v860 = vmul.f32 %v796, %v284
        %v861 = vmul.f32 %v797, %v285
        %v862 = vmul.f32 %v798, %v286
        %v863 = vmul.f32 %v799, %v287
        %v864 = vmul.f32 %v800, %v288
        %v865 = vmul.f32 %v801, %v289
        %v866 = vmul.f32 %v802, %v290
        %v867 = vmul.f32 %v803, %v291
        %v868 = vmul.f32 %v804, %v292
        %v869 = vmul.f32 %v805, %v293
        %v870 = vmul.f32 %v806, %v294
        %v871 = vmul.f32 %v807, %v295
        %v872 = vmul.f32 %v808, %v296
        %v873 = vmul.f32 %v809, %v297
        %v874 = vmul.f32 %v810, %v298
        %v875 = vmul.f32 %v811, %v299
        %v876 = vmul.f32 %v812, %v300
        %v877 = vmul.f32 %v813, %v301
        %v878 = vmul.f32 %v814, %v302
        %v879 = vmul.f32 %v815, %v303
        %v880 = vmul.f32 %v816, %v304
        %v881 = vmul.f32 %v817, %v305
        %v882 = vmul.f32 %v818, %v306
        %v883 = vmul.f32 %v819, %v307
        %v884 = vmul.f32 %v820, %v308
        %v885 = vmul.f32 %v821, %v309
        %v886 = vmul.f32 %v822, %v310
        %v887 = vmul.f32 %v823, %v311
        %v888 = vmul.f32 %v824, %v312
        %v889 = vmul.f32 %v825, %v313
        %v890 = vmul.f32 %v826, %v314
        %v891 = vmul.f32 %v827, %v315
        %v892 = vmul.f32 %v828, %v316
        %v893 = vmul.f32 %v829, %v317
        %v894 = vmul.f32 %v830, %v318
        %v895 = vmul.f32 %v831, %v319
        %v896 = vmul.f32 %v832, %v320
        %v897 = vmul.f32 %v833, %v321
        %v898 = vmul.f32 %v834, %v322
        %v899 = vmul.f32 %v835, %v323
        %v900 = vmul.f32 %v836, %v324
        %v901 = vmul.f32 %v837, %v325
        %v902 = vmul.f32 %v838, %v326
        %v903 = vmul.f32 %v839, %v327
        %v904 = vmul.f32 %v840, %v328
        %v905 = vmul.f32 %v841, %v329
        %v906 = vadd.f32 %v842, 1.0
        %v907 = vadd.f32 %v843, 1.0
        %v908 = vadd.f32 %v844, 1.0
        %v909 = vadd.f32 %v845, 1.0
        %v910 = vadd.f32 %v846, 1.0
        %v911 = vadd.f32 %v847, 1.0
        %v912 = vadd.f32 %v848, 1.0
        %v913 = vadd.f32 %v849, 1.0
        %v914 = vadd.f32 %v850, 1.0
        %v915 = vadd.f32 %v851, 1.0
        %v916 = vadd.f32 %v852, 1.0
        %v917 = vadd.f32 %v853, 1.0
        %v918 = vadd.f32 %v854, 1.0
        %v919 = vadd.f32 %v855, 1.0
        %v920 = vadd.f32 %v856, 1.0
        %v921 = vadd.f32 %v857, 1.0
        %v922 = vadd.f32 %v858, 1.0
        %v923 = vadd.f32 %v859, 1.0
        %v924 = vadd.f32 %v860, 1.0
        %v925 = vadd.f32 %v861, 1.0
        %v926 = vadd.f32 %v862, 1.0
        %v927 = vadd.f32 %v863, 1.0
        %v928 = vadd.f32 %v864, 1.0
        %v929 = vadd.f32 %v865, 1.0
        %v930 = vadd.f32 %v866, 1.0
        %v931 = vadd.f32 %v867, 1.0
        %v932 = vadd.f32 %v868, 1.0
        %v933 = vadd.f32 %v869, 1.0
        %v934 = vadd.f32 %v870, 1.0
        %v935 = vadd.f32 %v871, 1.0
        %v936 = vadd.f32 %v872, 1.0
        %v937 = vadd.f32 %v873, 1.0
        %v938 = vadd.f32 %v874, 1.0
        %v939 = vadd.f32 %v875, 1.0
        %v940 = vadd.f32 %v876, 1.0
        %v941 = vadd.f32 %v877, 1.0
        %v942 = vadd.f32 %v878, 1.0
        %v943 = vadd.f32 %v879, 1.0
        %v944 = vadd.f32 %v880, 1.0
        %v945 = vadd.f32 %v881, 1.0
        %v946 = vadd.f32 %v882, 1.0
        %v947 = vadd.f32 %v883, 1.0
        %v948 = vadd.f32 %v884, 1.0
        %v949 = vadd.f32 %v885, 1.0
        %v950 = vadd.f32 %v886, 1.0
        %v951 = vadd.f32 %v887, 1.0
        %v952 = vadd.f32 %v888, 1.0
        %v953 = vadd.f32 %v889, 1.0
        %v954 = vadd.f32 %v890, 1.0
        %v955 = vadd.f32 %v891, 1.0
        %v956 = vadd.f32 %v892, 1.0
        %v957 = vadd.f32 %v893, 1.0
        %v958 = vadd.f32 %v894, 1.0
        %v959 = vadd.f32 %v895, 1.0
        %v960 = vadd.f32 %v896, 1.0
        %v961 = vadd.f32 %v897, 1.0
        %v962 = vadd.f32 %v898, 1.0
        %v963 = vadd.f32 %v899, 1.0
        %v964 = vadd.f32 %v900, 1.0
        %v965 = vadd.f32 %v901, 1.0
        %v966 = vadd.f32 %v902, 1.0
        %v967 = vadd.f32 %v903, 1.0
        %v968 = vadd.f32 %v904, 1.0
        %v969 = vadd.f32 %v905, 1.0
        %v970 = vmul.f32 %v906, %v202
        %v971 = vmul.f32 %v907, %v203
        %v972 = vmul.f32 %v908, %v204
        %v973 = vmul.f32 %v909, %v205
        %v974 = vmul.f32 %v910, %v206
        %v975 = vmul.f32 %v911, %v207
        %v976 = vmul.f32 %v912, %v208
        %v977 = vmul.f32 %v913, %v209
        %v978 = vmul.f32 %v914, %v210
        %v979 = vmul.f32 %v915, %v211
        %v980 = vmul.f32 %v916, %v212
        %v981 = vmul.f32 %v917, %v213
        %v982 = vmul.f32 %v918, %v214
        %v983 = vmul.f32 %v919, %v215
        %v984 = vmul.f32 %v920, %v216
        %v985 = vmul.f32 %v921, %v217
        %v986 = vmul.f32 %v922, %v218
        %v987 = vmul.f32 %v923, %v219
        %v988 = vmul.f32 %v924, %v220
        %v989 = vmul.f32 %v925, %v221
        %v990 = vmul.f32 %v926, %v222
        %v991 = vmul.f32 %v927, %v223
        %v992 = vmul.f32 %v928, %v224
        %v993 = vmul.f32 %v929, %v225
        %v994 = vmul.f32 %v930, %v226
        %v995 = vmul.f32 %v931, %v227
        %v996 = vmul.f32 %v932, %v228
        %v997 = vmul.f32 %v933, %v229
        %v998 = vmul.f32 %v934, %v230
        %v999 = vmul.f32 %v935, %v231
        %v1000 = vmul.f32 %v936, %v232
        %v1001 = vmul.f32 %v937, %v233
        %v1002 = vmul.f32 %v938, %v234
        %v1003 = vmul.f32 %v939, %v235
        %v1004 = vmul.f32 %v940, %v236
        %v1005 = vmul.f32 %v941, %v237
        %v1006 = vmul.f32 %v942, %v238
        %v1007 = vmul.f32 %v943, %v239
        %v1008 = vmul.f32 %v944, %v240
        %v1009 = vmul.f32 %v945, %v241
        %v1010 = vmul.f32 %v946, %v242
        %v1011 = vmul.f32 %v947, %v243
        %v1012 = vmul.f32 %v948, %v244
        %v1013 = vmul.f32 %v949, %v245
        %v1014 = vmul.f32 %v950, %v246
        %v1015 = vmul.f32 %v951, %v247
        %v1016 = vmul.f32 %v952, %v248
        %v1017 = vmul.f32 %v953, %v249
        %v1018 = vmul.f32 %v954, %v250
        %v1019 = vmul.f32 %v955, %v251
        %v1020 = vmul.f32 %v956, %v252
        %v1021 = vmul.f32 %v957, %v253
        %v1022 = vmul.f32 %v958, %v254
        %v1023 = vmul.f32 %v959, %v255
        %v1024 = vmul.f32 %v960, %v256
        %v1025 = vmul.f32 %v961, %v257
        %v1026 = vmul.f32 %v962, %v258
        %v1027 = vmul.f32 %v963, %v259
        %v1028 = vmul.f32 %v964, %v260
        %v1029 = vmul.f32 %v965, %v261
        %v1030 = vmul.f32 %v966, %v262
        %v1031 = vmul.f32 %v967, %v263
        %v1032 = vmul.f32 %v968, %v264
        %v1033 = vmul.f32 %v969, %v265
        %v1034 = vmul.f32 %v970, %v970
        %v1035 = vmul.f32 %v971, %v971
        %v1036 = vmul.f32 %v972, %v972
        %v1037 = vmul.f32 %v973, %v973
        %v1038 = vmul.f32 %v974, %v974
        %v1039 = vmul.f32 %v975, %v975
        %v1040 = vmul.f32 %v976, %v976
        %v1041 = vmul.f32 %v977, %v977
        %v1042 = vmul.f32 %v978, %v978
        %v1043 = vmul.f32 %v979, %v979
        %v1044 = vmul.f32 %v980, %v980
        %v1045 = vmul.f32 %v981, %v981
        %v1046 = vmul.f32 %v982, %v982
        %v1047 = vmul.f32 %v983, %v983
        %v1048 = vmul.f32 %v984, %v984
        %v1049 = vmul.f32 %v985, %v985
        %v1050 = vmul.f32 %v986, %v986
        %v1051 = vmul.f32 %v987, %v987
        %v1052 = vmul.f32 %v988, %v988
        %v1053 = vmul.f32 %v989, %v989
        %v1054 = vmul.f32 %v990, %v990
        %v1055 = vmul.f32 %v991, %v991
        %v1056 = vmul.f32 %v992, %v992
        %v1057 = vmul.f32 %v993, %v993
        %v1058 = vmul.f32 %v994, %v994
        %v1059 = vmul.f32 %v995, %v995
        %v1060 = vmul.f32 %v996, %v996
        %v1061 = vmul.f32 %v997, %v997
        %v1062 = vmul.f32 %v998, %v998
        %v1063 = vmul.f32 %v999, %v999
        %v1064 = vmul.f32 %v1000, %v1000
        %v1065 = vmul.f32 %v1001, %v1001
        %v1066 = vmul.f32 %v1002, %v1002
        %v1067 = vmul.f32 %v1003, %v1003
        %v1068 = vmul.f32 %v1004, %v1004
        %v1069 = vmul.f32 %v1005, %v1005
        %v1070 = vmul.f32 %v1006, %v1006
        %v1071 = vmul.f32 %v1007, %v1007
        %v1072 = vmul.f32 %v1008, %v1008
        %v1073 = vmul.f32 %v1009, %v1009
        %v1074 = vmul.f32 %v1010, %v1010
        %v1075 = vmul.f32 %v1011, %v1011
        %v1076 = vmul.f32 %v1012, %v1012
        %v1077 = vmul.f32 %v1013, %v1013
        %v1078 = vmul.f32 %v1014, %v1014
        %v1079 = vmul.f32 %v1015, %v1015
        %v1080 = vmul.f32 %v1016, %v1016
        %v1081 = vmul.f32 %v1017, %v1017
        %v1082 = vmul.f32 %v1018, %v1018
        %v1083 = vmul.f32 %v1019, %v1019
        %v1084 = vmul.f32 %v1020, %v1020
        %v1085 = vmul.f32 %v1021, %v1021
        %v1086 = vmul.f32 %v1022, %v1022
        %v1087 = vmul.f32 %v1023, %v1023
        %v1088 = vmul.f32 %v1024, %v1024
        %v1089 = vmul.f32 %v1025, %v1025
        %v1090 = vmul.f32 %v1026, %v1026
        %v1091 = vmul.f32 %v1027, %v1027
        %v1092 = vmul.f32 %v1028, %v1028
        %v1093 = vmul.f32 %v1029, %v1029
        %v1094 = vmul.f32 %v1030, %v1030
        %v1095 = vmul.f32 %v1031, %v1031
        %v1096 = vmul.f32 %v1032, %v1032
        %v1097 = vmul.f32 %v1033, %v1033
        %v1098 = vsub.f32 1.0, %v1034
        %v1099 = vsub.f32 1.0, %v1035
        %v1100 = vsub.f32 1.0, %v1036
        %v1101 = vsub.f32 1.0, %v1037
        %v1102 = vsub.f32 1.0, %v1038
        %v1103 = vsub.f32 1.0, %v1039
        %v1104 = vsub.f32 1.0, %v1040
        %v1105 = vsub.f32 1.0, %v1041
        %v1106 = vsub.f32 1.0, %v1042
        %v1107 = vsub.f32 1.0, %v1043
        %v1108 = vsub.f32 1.0, %v1044
        %v1109 = vsub.f32 1.0, %v1045
        %v1110 = vsub.f32 1.0, %v1046
        %v1111 = vsub.f32 1.0, %v1047
        %v1112 = vsub.f32 1.0, %v1048
        %v1113 = vsub.f32 1.0, %v1049
        %v1114 = vsub.f32 1.0, %v1050
        %v1115 = vsub.f32 1.0, %v1051
        %v1116 = vsub.f32 1.0, %v1052
        %v1117 = vsub.f32 1.0, %v1053
        %v1118 = vsub.f32 1.0, %v1054
        %v1119 = vsub.f32 1.0, %v1055
        %v1120 = vsub.f32 1.0, %v1056
        %v1121 = vsub.f32 1.0, %v1057
        %v1122 = vsub.f32 1.0, %v1058
        %v1123 = vsub.f32 1.0, %v1059
        %v1124 = vsub.f32 1.0, %v1060
        %v1125 = vsub.f32 1.0, %v1061
        %v1126 = vsub.f32 1.0, %v1062
        %v1127 = vsub.f32 1.0, %v1063
        %v1128 = vsub.f32 1.0, %v1064
        %v1129 = vsub.f32 1.0, %v1065
        %v1130 = vsub.f32 1.0, %v1066
        %v1131 = vsub.f32 1.0, %v1067
        %v1132 = vsub.f32 1.0, %v1068
        %v1133 = vsub.f32 1.0, %v1069
        %v1134 = vsub.f32 1.0, %v1070
        %v1135 = vsub.f32 1.0, %v1071
        %v1136 = vsub.f32 1.0, %v1072
        %v1137 = vsub.f32 1.0, %v1073
        %v1138 = vsub.f32 1.0, %v1074
        %v1139 = vsub.f32 1.0, %v1075
        %v1140 = vsub.f32 1.0, %v1076
        %v1141 = vsub.f32 1.0, %v1077
        %v1142 = vsub.f32 1.0, %v1078
        %v1143 = vsub.f32 1.0, %v1079
        %v1144 = vsub.f32 1.0, %v1080
        %v1145 = vsub.f32 1.0, %v1081
        %v1146 = vsub.f32 1.0, %v1082
        %v1147 = vsub.f32 1.0, %v1083
        %v1148 = vsub.f32 1.0, %v1084
        %v1149 = vsub.f32 1.0, %v1085
        %v1150 = vsub.f32 1.0, %v1086
        %v1151 = vsub.f32 1.0, %v1087
        %v1152 = vsub.f32 1.0, %v1088
        %v1153 = vsub.f32 1.0, %v1089
        %v1154 = vsub.f32 1.0, %v1090
        %v1155 = vsub.f32 1.0, %v1091
        %v1156 = vsub.f32 1.0, %v1092
        %v1157 = vsub.f32 1.0, %v1093
        %v1158 = vsub.f32 1.0, %v1094
        %v1159 = vsub.f32 1.0, %v1095
        %v1160 = vsub.f32 1.0, %v1096
        %v1161 = vsub.f32 1.0, %v1097
        %vm1162 = vcmp.lt.f32.partialorder %v138, 5.0
        %vm1163 = vcmp.lt.f32.partialorder %v139, 5.0
        %vm1164 = vcmp.lt.f32.partialorder %v140, 5.0
        %vm1165 = vcmp.lt.f32.partialorder %v141, 5.0
        %vm1166 = vcmp.lt.f32.partialorder %v142, 5.0
        %vm1167 = vcmp.lt.f32.partialorder %v143, 5.0
        %vm1168 = vcmp.lt.f32.partialorder %v144, 5.0
        %vm1169 = vcmp.lt.f32.partialorder %v145, 5.0
        %vm1170 = vcmp.lt.f32.partialorder %v146, 5.0
        %vm1171 = vcmp.lt.f32.partialorder %v147, 5.0
        %vm1172 = vcmp.lt.f32.partialorder %v148, 5.0
        %vm1173 = vcmp.lt.f32.partialorder %v149, 5.0
        %vm1174 = vcmp.lt.f32.partialorder %v150, 5.0
        %vm1175 = vcmp.lt.f32.partialorder %v151, 5.0
        %vm1176 = vcmp.lt.f32.partialorder %v152, 5.0
        %vm1177 = vcmp.lt.f32.partialorder %v153, 5.0
        %vm1178 = vcmp.lt.f32.partialorder %v154, 5.0
        %vm1179 = vcmp.lt.f32.partialorder %v155, 5.0
        %vm1180 = vcmp.lt.f32.partialorder %v156, 5.0
        %vm1181 = vcmp.lt.f32.partialorder %v157, 5.0
        %vm1182 = vcmp.lt.f32.partialorder %v158, 5.0
        %vm1183 = vcmp.lt.f32.partialorder %v159, 5.0
        %vm1184 = vcmp.lt.f32.partialorder %v160, 5.0
        %vm1185 = vcmp.lt.f32.partialorder %v161, 5.0
        %vm1186 = vcmp.lt.f32.partialorder %v162, 5.0
        %vm1187 = vcmp.lt.f32.partialorder %v163, 5.0
        %vm1188 = vcmp.lt.f32.partialorder %v164, 5.0
        %vm1189 = vcmp.lt.f32.partialorder %v165, 5.0
        %vm1190 = vcmp.lt.f32.partialorder %v166, 5.0
        %vm1191 = vcmp.lt.f32.partialorder %v167, 5.0
        %vm1192 = vcmp.lt.f32.partialorder %v168, 5.0
        %vm1193 = vcmp.lt.f32.partialorder %v169, 5.0
        %vm1194 = vcmp.lt.f32.partialorder %v170, 5.0
        %vm1195 = vcmp.lt.f32.partialorder %v171, 5.0
        %vm1196 = vcmp.lt.f32.partialorder %v172, 5.0
        %vm1197 = vcmp.lt.f32.partialorder %v173, 5.0
        %vm1198 = vcmp.lt.f32.partialorder %v174, 5.0
        %vm1199 = vcmp.lt.f32.partialorder %v175, 5.0
        %vm1200 = vcmp.lt.f32.partialorder %v176, 5.0
        %vm1201 = vcmp.lt.f32.partialorder %v177, 5.0
        %vm1202 = vcmp.lt.f32.partialorder %v178, 5.0
        %vm1203 = vcmp.lt.f32.partialorder %v179, 5.0
        %vm1204 = vcmp.lt.f32.partialorder %v180, 5.0
        %vm1205 = vcmp.lt.f32.partialorder %v181, 5.0
        %vm1206 = vcmp.lt.f32.partialorder %v182, 5.0
        %vm1207 = vcmp.lt.f32.partialorder %v183, 5.0
        %vm1208 = vcmp.lt.f32.partialorder %v184, 5.0
        %vm1209 = vcmp.lt.f32.partialorder %v185, 5.0
        %vm1210 = vcmp.lt.f32.partialorder %v186, 5.0
        %vm1211 = vcmp.lt.f32.partialorder %v187, 5.0
        %vm1212 = vcmp.lt.f32.partialorder %v188, 5.0
        %vm1213 = vcmp.lt.f32.partialorder %v189, 5.0
        %vm1214 = vcmp.lt.f32.partialorder %v190, 5.0
        %vm1215 = vcmp.lt.f32.partialorder %v191, 5.0
        %vm1216 = vcmp.lt.f32.partialorder %v192, 5.0
        %vm1217 = vcmp.lt.f32.partialorder %v193, 5.0
        %vm1218 = vcmp.lt.f32.partialorder %v194, 5.0
        %vm1219 = vcmp.lt.f32.partialorder %v195, 5.0
        %vm1220 = vcmp.lt.f32.partialorder %v196, 5.0
        %vm1221 = vcmp.lt.f32.partialorder %v197, 5.0
        %vm1222 = vcmp.lt.f32.partialorder %v198, 5.0
        %vm1223 = vcmp.lt.f32.partialorder %v199, 5.0
        %vm1224 = vcmp.lt.f32.partialorder %v200, 5.0
        %vm1225 = vcmp.lt.f32.partialorder %v201, 5.0
        %v1226 = vsel %vm1162, %v1098, 0.0
        %v1227 = vsel %vm1163, %v1099, 0.0
        %v1228 = vsel %vm1164, %v1100, 0.0
        %v1229 = vsel %vm1165, %v1101, 0.0
        %v1230 = vsel %vm1166, %v1102, 0.0
        %v1231 = vsel %vm1167, %v1103, 0.0
        %v1232 = vsel %vm1168, %v1104, 0.0
        %v1233 = vsel %vm1169, %v1105, 0.0
        %v1234 = vsel %vm1170, %v1106, 0.0
        %v1235 = vsel %vm1171, %v1107, 0.0
        %v1236 = vsel %vm1172, %v1108, 0.0
        %v1237 = vsel %vm1173, %v1109, 0.0
        %v1238 = vsel %vm1174, %v1110, 0.0
        %v1239 = vsel %vm1175, %v1111, 0.0
        %v1240 = vsel %vm1176, %v1112, 0.0
        %v1241 = vsel %vm1177, %v1113, 0.0
        %v1242 = vsel %vm1178, %v1114, 0.0
        %v1243 = vsel %vm1179, %v1115, 0.0
        %v1244 = vsel %vm1180, %v1116, 0.0
        %v1245 = vsel %vm1181, %v1117, 0.0
        %v1246 = vsel %vm1182, %v1118, 0.0
        %v1247 = vsel %vm1183, %v1119, 0.0
        %v1248 = vsel %vm1184, %v1120, 0.0
        %v1249 = vsel %vm1185, %v1121, 0.0
        %v1250 = vsel %vm1186, %v1122, 0.0
        %v1251 = vsel %vm1187, %v1123, 0.0
        %v1252 = vsel %vm1188, %v1124, 0.0
        %v1253 = vsel %vm1189, %v1125, 0.0
        %v1254 = vsel %vm1190, %v1126, 0.0
        %v1255 = vsel %vm1191, %v1127, 0.0
        %v1256 = vsel %vm1192, %v1128, 0.0
        %v1257 = vsel %vm1193, %v1129, 0.0
        %v1258 = vsel %vm1194, %v1130, 0.0
        %v1259 = vsel %vm1195, %v1131, 0.0
        %v1260 = vsel %vm1196, %v1132, 0.0
        %v1261 = vsel %vm1197, %v1133, 0.0
        %v1262 = vsel %vm1198, %v1134, 0.0
        %v1263 = vsel %vm1199, %v1135, 0.0
        %v1264 = vsel %vm1200, %v1136, 0.0
        %v1265 = vsel %vm1201, %v1137, 0.0
        %v1266 = vsel %vm1202, %v1138, 0.0
        %v1267 = vsel %vm1203, %v1139, 0.0
        %v1268 = vsel %vm1204, %v1140, 0.0
        %v1269 = vsel %vm1205, %v1141, 0.0
        %v1270 = vsel %vm1206, %v1142, 0.0
        %v1271 = vsel %vm1207, %v1143, 0.0
        %v1272 = vsel %vm1208, %v1144, 0.0
        %v1273 = vsel %vm1209, %v1145, 0.0
        %v1274 = vsel %vm1210, %v1146, 0.0
        %v1275 = vsel %vm1211, %v1147, 0.0
        %v1276 = vsel %vm1212, %v1148, 0.0
        %v1277 = vsel %vm1213, %v1149, 0.0
        %v1278 = vsel %vm1214, %v1150, 0.0
        %v1279 = vsel %vm1215, %v1151, 0.0
        %v1280 = vsel %vm1216, %v1152, 0.0
        %v1281 = vsel %vm1217, %v1153, 0.0
        %v1282 = vsel %vm1218, %v1154, 0.0
        %v1283 = vsel %vm1219, %v1155, 0.0
        %v1284 = vsel %vm1220, %v1156, 0.0
        %v1285 = vsel %vm1221, %v1157, 0.0
        %v1286 = vsel %vm1222, %v1158, 0.0
        %v1287 = vsel %vm1223, %v1159, 0.0
        %v1288 = vsel %vm1224, %v1160, 0.0
        %v1289 = vsel %vm1225, %v1161, 0.0
        %1290 = vst [vmem:[%s135] sm:$0xff] %v1226
        %1291 = vst [vmem:[%s135 + $0x8] sm:$0xff] %v1227
        %1292 = vst [vmem:[%s135 + $0x10] sm:$0xff] %v1228
        %1293 = vst [vmem:[%s135 + $0x18] sm:$0xff] %v1229
        %1294 = vst [vmem:[%s135 + $0x20] sm:$0xff] %v1230
        %1295 = vst [vmem:[%s135 + $0x28] sm:$0xff] %v1231
        %1296 = vst [vmem:[%s135 + $0x30] sm:$0xff] %v1232
        %1297 = vst [vmem:[%s135 + $0x38] sm:$0xff] %v1233
        %1298 = vst [vmem:[%s135 + $0x40] sm:$0xff] %v1234
        %1299 = vst [vmem:[%s135 + $0x48] sm:$0xff] %v1235
        %1300 = vst [vmem:[%s135 + $0x50] sm:$0xff] %v1236
        %1301 = vst [vmem:[%s135 + $0x58] sm:$0xff] %v1237
        %1302 = vst [vmem:[%s135 + $0x60] sm:$0xff] %v1238
        %1303 = vst [vmem:[%s135 + $0x68] sm:$0xff] %v1239
        %1304 = vst [vmem:[%s135 + $0x70] sm:$0xff] %v1240
        %1305 = vst [vmem:[%s135 + $0x78] sm:$0xff] %v1241
        %1306 = vst [vmem:[%s135 + $0x80] sm:$0xff] %v1242
        %1307 = vst [vmem:[%s135 + $0x88] sm:$0xff] %v1243
        %1308 = vst [vmem:[%s135 + $0x90] sm:$0xff] %v1244
        %1309 = vst [vmem:[%s135 + $0x98] sm:$0xff] %v1245
        %1310 = vst [vmem:[%s135 + $0xa0] sm:$0xff] %v1246
        %1311 = vst [vmem:[%s135 + $0xa8] sm:$0xff] %v1247
        %1312 = vst [vmem:[%s135 + $0xb0] sm:$0xff] %v1248
        %1313 = vst [vmem:[%s135 + $0xb8] sm:$0xff] %v1249
        %1314 = vst [vmem:[%s135 + $0xc0] sm:$0xff] %v1250
        %1315 = vst [vmem:[%s135 + $0xc8] sm:$0xff] %v1251
        %1316 = vst [vmem:[%s135 + $0xd0] sm:$0xff] %v1252
        %1317 = vst [vmem:[%s135 + $0xd8] sm:$0xff] %v1253
        %1318 = vst [vmem:[%s135 + $0xe0] sm:$0xff] %v1254
        %1319 = vst [vmem:[%s135 + $0xe8] sm:$0xff] %v1255
        %1320 = vst [vmem:[%s135 + $0xf0] sm:$0xff] %v1256
        %1321 = vst [vmem:[%s135 + $0xf8] sm:$0xff] %v1257
        %1322 = vst [vmem:[%s135 + $0x100] sm:$0xff] %v1258
        %1323 = vst [vmem:[%s135 + $0x108] sm:$0xff] %v1259
        %1324 = vst [vmem:[%s135 + $0x110] sm:$0xff] %v1260
        %1325 = vst [vmem:[%s135 + $0x118] sm:$0xff] %v1261
        %1326 = vst [vmem:[%s135 + $0x120] sm:$0xff] %v1262
        %1327 = vst [vmem:[%s135 + $0x128] sm:$0xff] %v1263
        %1328 = vst [vmem:[%s135 + $0x130] sm:$0xff] %v1264
        %1329 = vst [vmem:[%s135 + $0x138] sm:$0xff] %v1265
        %1330 = vst [vmem:[%s135 + $0x140] sm:$0xff] %v1266
        %1331 = vst [vmem:[%s135 + $0x148] sm:$0xff] %v1267
        %1332 = vst [vmem:[%s135 + $0x150] sm:$0xff] %v1268
        %1333 = vst [vmem:[%s135 + $0x158] sm:$0xff] %v1269
        %1334 = vst [vmem:[%s135 + $0x160] sm:$0xff] %v1270
        %1335 = vst [vmem:[%s135 + $0x168] sm:$0xff] %v1271
        %1336 = vst [vmem:[%s135 + $0x170] sm:$0xff] %v1272
        %1337 = vst [vmem:[%s135 + $0x178] sm:$0xff] %v1273
        %1338 = vst [vmem:[%s135 + $0x180] sm:$0xff] %v1274
        %1339 = vst [vmem:[%s135 + $0x188] sm:$0xff] %v1275
        %1340 = vst [vmem:[%s135 + $0x190] sm:$0xff] %v1276
        %1341 = vst [vmem:[%s135 + $0x198] sm:$0xff] %v1277
        %1342 = vst [vmem:[%s135 + $0x1a0] sm:$0xff] %v1278
        %1343 = vst [vmem:[%s135 + $0x1a8] sm:$0xff] %v1279
        %1344 = vst [vmem:[%s135 + $0x1b0] sm:$0xff] %v1280
        %1345 = vst [vmem:[%s135 + $0x1b8] sm:$0xff] %v1281
        %1346 = vst [vmem:[%s135 + $0x1c0] sm:$0xff] %v1282
        %1347 = vst [vmem:[%s135 + $0x1c8] sm:$0xff] %v1283
        %1348 = vst [vmem:[%s135 + $0x1d0] sm:$0xff] %v1284
        %1349 = vst [vmem:[%s135 + $0x1d8] sm:$0xff] %v1285
        %1350 = vst [vmem:[%s135 + $0x1e0] sm:$0xff] %v1286
        %1351 = vst [vmem:[%s135 + $0x1e8] sm:$0xff] %v1287
        %1352 = vst [vmem:[%s135 + $0x1f0] sm:$0xff] %v1288
        %1353 = vst [vmem:[%s135 + $0x1f8] sm:$0xff] %v1289
        %s1354 = sand.u32 %s52, 1
        %s1355 = scalar_lea.sflag [#allocation4], %s1354
        %s1356 = sand.u32 %s52, 1
        %s1357 = smul.addr %s1356, 512
        %s1358 = scalar_lea.vmem [#allocation5], %s1357
        // Predicated region
        $region29: #{tpu_custom_call.1} parent=23 // pred_check
          %p1359 = pneg %p62
        $region30: #{tpu_custom_call.1} parent=23 // pred_check_branch
          %1361 = sbr.rel (%p1359) target = $region32
        $region31: #{tpu_custom_call.1} parent=23 // pred_region
          %s1362 = smul.u32 8, %s18
          %s1364 = ssub.s32 8192, 8192
          %1365 = vsyncadd %s1355, %s1364
          %s1366 = smul.addr %s1362, 8
          %s1367 = smul.addr %s1366, 128
          %s1368 = scalar_lea.hbm %s1, %s1367
          %s1369 = sshll.u32 %s1358, 4
          %s1370 = int_to_ptr.vmem [resolvable:$true] %s1369
          %1375 = dma.vmem_to_hbm [thread:$0]  %s1370, 8192, %s1368, %s1355, 1024, 1024, 64
        $region32: #{tpu_custom_call.1} parent=23 // pred_fallthru
          _
      $region24: #{tpu_custom_call.1} parent=5 // pred_fallthru
        _
      %p1376 = scmp.le.s32.totalorder 2, %s13
      // Predicated region
      $region33: #{tpu_custom_call.1} parent=5 // pred_check
        %p1377 = pneg %p1376
      $region34: #{tpu_custom_call.1} parent=5 // pred_check_branch
        %1379 = sbr.rel (%p1377) target = $region36
      $region35: #{tpu_custom_call.1} parent=5 // pred_region
        %s1380 = ssub.s32 %s13, 2
        // Predicated region
        $region37: #{tpu_custom_call.1} parent=35 // pred_check
          %p1381 = pneg %p68
        $region38: #{tpu_custom_call.1} parent=35 // pred_check_branch
          %1383 = sbr.rel (%p1381) target = $region40
        $region39: #{tpu_custom_call.1} parent=35 // pred_region
          %s1384 = sand.u32 %s53, 1
          %s1385 = scalar_lea.sflag [#allocation4], %s1384
          %s1386 = sand.u32 %s53, 1
          %s1387 = smul.addr %s1386, 512
          %s1388 = scalar_lea.vmem [#allocation5], %s1387
          %1389 = dma.done %s1385, 8192
        $region40: #{tpu_custom_call.1} parent=35 // pred_fallthru
          _
      $region36: #{tpu_custom_call.1} parent=5 // pred_fallthru
        _
    $region6: #{tpu_custom_call.1} parent=1 // loop_footer
      %s17 = sadd.s32 1, %s13
    $region7: #{tpu_custom_call.1} parent=1 // loop_footer_branch
      %12 = sbr.rel target = $region3
    $region8: #{tpu_custom_call.1} parent=1 // loop_exit
      _
    %1390 = vsyncpa [#allocation3], 1
    %s1391 = scalar_lea.sflag [#allocation3], 1
    %1392 = vsyncpa %s1391, 1
    %1393 = vsyncpa [#allocation4], 1
    %s1394 = scalar_lea.sflag [#allocation4], 1
    %1395 = vsyncpa %s1394, 1

</llo_original>
